<compile_context>
chip_gen: v7x
topology: tpu7x:2x2x1
jax: 0.10.0
libtpu: 0.0.40
codegen_flags: <defaults>
</compile_context>

<pallas_src>
import functools

import jax
import jax.numpy as jnp
from jax.experimental import pallas as pl
from jax.experimental.pallas import tpu as pltpu


# ------------------------------ Pallas kernels ------------------------------

def _se_fused_kernel(x_ref, w1_ref, b1_ref, w2t_ref, b2_ref, o_ref, *, inv_hw):
    """NB samples per step: pool -> fc1 -> ReLU -> fc2 -> hardsigmoid -> rescale.

    x_ref:   (NB, C, HW)   w1_ref: (C, Cr)   b1_ref: (1, Cr)
    w2t_ref: (C, Cr)       b2_ref: (1, C)    o_ref:  (NB, C, HW)
    """
    x = x_ref[...]                                                     # native dtype
    # Global average pool, accumulated in f32.
    pooled = jnp.sum(x.astype(jnp.float32), axis=-1, keepdims=True) * inv_hw    # (NB, C, 1)
    # fc1 (1x1 conv): h[n, j] = sum_c w1[c, j] * pooled[n, c] + b1[j]  (VPU+XLU, not MXU)
    h = jnp.sum(w1_ref[...][None, :, :] * pooled, axis=1) + b1_ref[...]          # (NB, Cr)
    h = jnp.maximum(h, 0.0)
    # fc2 (1x1 conv): z[n, c] = sum_j w2t[c, j] * h[n, j] + b2[c]
    z = jnp.sum(w2t_ref[...][None, :, :] * h[:, None, :], axis=-1) + b2_ref[...]  # (NB, C)
    hs = jnp.clip(z * (1.0 / 6.0) + 0.5, 0.0, 1.0)                    # Hardsigmoid
    # Channel rescale in the feature map's native dtype (no full-block f32 upcast).
    o_ref[...] = (x * hs[:, :, None].astype(x.dtype)).astype(o_ref.dtype)


def _se_pool_excite_kernel(x_ref, w1_ref, b1_ref, w2t_ref, b2_ref,
                           s_ref, acc_ref, *, inv_hw):
    """Tiled path, pass 1: spatial-tile grid reduction -> per-(n, c) scale.

    x_ref: (1, C, hw_tile)  s_ref: (1, C, 1)  acc_ref: (C, 1) f32 scratch
    """
    t = pl.program_id(1)

    @pl.when(t == 0)
    def _():
        acc_ref[...] = jnp.zeros_like(acc_ref)

    acc_ref[...] += jnp.sum(x_ref[0].astype(jnp.float32), axis=-1, keepdims=True)

    @pl.when(t == pl.num_programs(1) - 1)
    def _():
        pooled = acc_ref[...] * inv_hw                                           # (C, 1)
        h = jnp.sum(w1_ref[...] * pooled, axis=0, keepdims=True) + b1_ref[...]   # (1, Cr)
        h = jnp.maximum(h, 0.0)
        z = jnp.sum(w2t_ref[...] * h, axis=-1, keepdims=True) + b2_ref[...]      # (C, 1)
        # Scale tensor is tiny (N*C f32); keep (C, 1) to avoid an in-kernel
        # transpose per rescale tile in pass 2.
        s_ref[0] = jnp.clip(z * (1.0 / 6.0) + 0.5, 0.0, 1.0).astype(s_ref.dtype)


def _se_rescale_kernel(x_ref, s_ref, o_ref):
    """Tiled path, pass 2: fully parallel channel-wise rescale (native dtype)."""
    x = x_ref[0]                                          # (C, hw_tile) native dtype
    scale = s_ref[0].astype(x.dtype)                      # (C, 1)
    o_ref[0] = (x * scale).astype(o_ref.dtype)


# ------------------------------ sizing helpers -------------------------------

def _largest_divisor_leq(n, cap):
    cap = max(1, min(n, cap))
    for d in range(cap, 0, -1):
        if n % d == 0:
            return d
    return 1


def _vmem_budget_bytes():
    """Usable per-kernel VMEM budget derived from the chip.

    v7x has only 64 MiB physical VMEM per TensorCore (vs 128 MiB on v5e/v6e);
    leave headroom for compiler-internal scratch and pipeline buffers.
    """
    try:
        cap = int(pltpu.get_tpu_info().vmem_capacity_bytes)
    except Exception:
        cap = 64 << 20            # safe lower bound (v7x)
    return max(32 << 20, min(cap - (16 << 20), 112 << 20))


def _choose_nb(N, per_sample_bytes, per_block_cost, budget, target_bytes=1 << 20):
    """Samples per fused block: ~1 MiB x-block, bounded by the VMEM budget."""
    nb_cap_fit = max(1, (budget - (2 << 20)) // max(1, per_block_cost))
    nb_cap_tgt = max(1, target_bytes // max(1, per_sample_bytes))
    return _largest_divisor_leq(N, min(nb_cap_fit, nb_cap_tgt))


def _choose_hw_tile(HW, C, dtype_bytes, budget, target_bytes=2 << 20):
    """Largest 128-multiple divisor of HW giving a ~1-2 MiB (1, C, hw_tile) block."""
    cap_bytes = min(target_bytes,
                    max(128 * C * dtype_bytes, (budget - (2 << 20)) // 5))
    cap = max(128, (cap_bytes // (C * dtype_bytes)) // 128 * 128)
    best, t = 128, 128
    while t <= min(HW, cap):
        if HW % t == 0:
            best = t
        t += 128
    return best


# -------------------------------- wrapper -----------------------------------

def es_se_forward(x_nchw, params, *, hw_tile=None):
    """ES_SEModule forward.  x_nchw: (N, C, H, W), exactly as the torch module."""
    N, C, H, W = x_nchw.shape
    HW = H * W
    Cr = params["conv1_w"].shape[0]
    db = jnp.dtype(x_nchw.dtype).itemsize
    inv_hw = 1.0 / float(HW)

    x = x_nchw.reshape(N, C, HW)                       # free view, stays NCHW
    w1 = params["conv1_w"].T                           # (C, Cr)
    b1 = params["conv1_b"].reshape(1, Cr)
    w2t = params["conv2_w"]                            # (C, Cr) == torch (out, in)

    budget = _vmem_budget_bytes()
    per_sample = C * HW * db
    per_block_cost = 4 * per_sample + 4 * C * HW       # 2x-buffered in+out + f32 pool temp

    force_tiled = hw_tile is not None and hw_tile < HW
    force_fused = hw_tile is not None and hw_tile >= HW
    fused_fits = per_block_cost + (2 << 20) <= budget  # NB = 1 footprint
    can_tile = (HW % 128 == 0) and HW >= 256
    use_tiled = force_tiled or (not force_fused and not fused_fits and can_tile)
    # If the map is huge but HW is not a 128-multiple we still take the fused
    # path with NB=1 and let the compiler do its best within the budget.

    if not use_tiled:
        nb = _choose_nb(N, per_sample, per_block_cost, budget)
        need = nb * per_block_cost + (2 << 20)
        vmem_limit = int(max(16 << 20, min(need, budget)))
        b2 = params["conv2_b"].reshape(1, C)

        w_specs = [
            pl.BlockSpec((C, Cr), lambda n: (0, 0)),
            pl.BlockSpec((1, Cr), lambda n: (0, 0)),
            pl.BlockSpec((C, Cr), lambda n: (0, 0)),
            pl.BlockSpec((1, C), lambda n: (0, 0)),
        ]
        out = pl.pallas_call(
            functools.partial(_se_fused_kernel, inv_hw=inv_hw),
            out_shape=jax.ShapeDtypeStruct((N, C, HW), x.dtype),
            grid=(N // nb,),
            in_specs=[pl.BlockSpec((nb, C, HW), lambda n: (n, 0, 0))] + w_specs,
            out_specs=pl.BlockSpec((nb, C, HW), lambda n: (n, 0, 0)),
            compiler_params=pltpu.CompilerParams(
                dimension_semantics=("parallel",),
                vmem_limit_bytes=vmem_limit),
        )(x, w1, b1, w2t, b2)
    else:
        if hw_tile is None:
            hw_tile = _choose_hw_tile(HW, C, db, budget)
        assert hw_tile % 128 == 0 and HW % hw_tile == 0, \
            "hw_tile must be a 128-multiple dividing H*W"
        T = HW // hw_tile
        b2c = params["conv2_b"].reshape(C, 1)

        x_block = C * hw_tile * db
        vmem1 = int(max(16 << 20,
                        min(2 * x_block + 4 * C * hw_tile + (2 << 20), budget)))
        vmem2 = int(max(16 << 20,
                        min(4 * x_block + 4 * C * hw_tile + (2 << 20), budget)))

        w_specs = [
            pl.BlockSpec((C, Cr), lambda n, t: (0, 0)),
            pl.BlockSpec((1, Cr), lambda n, t: (0, 0)),
            pl.BlockSpec((C, Cr), lambda n, t: (0, 0)),
            pl.BlockSpec((C, 1), lambda n, t: (0, 0)),
        ]

        scale = pl.pallas_call(
            functools.partial(_se_pool_excite_kernel, inv_hw=inv_hw),
            out_shape=jax.ShapeDtypeStruct((N, C, 1), jnp.float32),
            grid=(N, T),
            in_specs=[pl.BlockSpec((1, C, hw_tile), lambda n, t: (n, 0, t))] + w_specs,
            out_specs=pl.BlockSpec((1, C, 1), lambda n, t: (n, 0, 0)),
            scratch_shapes=[pltpu.VMEM((C, 1), jnp.float32)],
            compiler_params=pltpu.CompilerParams(
                dimension_semantics=("parallel", "arbitrary"),
                vmem_limit_bytes=vmem1),
        )(x, w1, b1, w2t, b2c)

        out = pl.pallas_call(
            _se_rescale_kernel,
            out_shape=jax.ShapeDtypeStruct((N, C, HW), x.dtype),
            grid=(N, T),
            in_specs=[
                pl.BlockSpec((1, C, hw_tile), lambda n, t: (n, 0, t)),
                pl.BlockSpec((1, C, 1), lambda n, t: (n, 0, 0)),
            ],
            out_specs=pl.BlockSpec((1, C, hw_tile), lambda n, t: (n, 0, t)),
            compiler_params=pltpu.CompilerParams(
                dimension_semantics=("parallel", "parallel"),
                vmem_limit_bytes=vmem2),
        )(x, scale)

    return out.reshape(N, C, H, W)


# ---------------------------- params & reference ----------------------------

def init_es_se_params(key, channel, reduction=4):
    """Weights in torch layout: conv1 (C/r, C), conv2 (C, C/r), with biases."""
    cr = channel // reduction
    k1, k2, k3, k4 = jax.random.split(key, 4)
    return dict(
        conv1_w=0.2 * jax.random.normal(k1, (cr, channel), jnp.float32),
        conv1_b=0.1 * jax.random.normal(k2, (cr,), jnp.float32),
        conv2_w=0.2 * jax.random.normal(k3, (channel, cr), jnp.float32),
        conv2_b=0.1 * jax.random.normal(k4, (channel,), jnp.float32),
    )


def es_se_reference(x, p):
    """Pure-JAX mirror of the PyTorch ES_SEModule.forward (NCHW)."""
    pooled = jnp.mean(x, axis=(2, 3))                               # (N, C)
    h = jnp.maximum(pooled @ p["conv1_w"].T + p["conv1_b"], 0.0)    # (N, C/r)
    z = h @ p["conv2_w"].T + p["conv2_b"]                           # (N, C)
    hs = jnp.clip(z / 6.0 + 0.5, 0.0, 1.0)                          # Hardsigmoid
    return x * hs[:, :, None, None]


# ----------------------------------- main ------------------------------------

if __name__ == "__main__":
    key = jax.random.PRNGKey(0)
    kx, kp = jax.random.split(key)

    N, C, H, W = 2, 16, 16, 16          # reduction=4 -> hidden = 4
    x = jax.random.normal(kx, (N, C, H, W), jnp.float32)
    params = init_es_se_params(kp, C, reduction=4)

    ref = es_se_reference(x, params)

    # Fused single-pass kernel (default path, NB samples per grid step).
    out_fused = jax.block_until_ready(es_se_forward(x, params))
    assert out_fused.shape == (N, C, H, W), out_fused.shape
    assert bool(jnp.allclose(out_fused, ref, rtol=1e-4, atol=1e-4)), "fused path mismatch"

    # Tiled (grid-reduction + parallel rescale) path, forced via hw_tile.
    out_tiled = jax.block_until_ready(es_se_forward(x, params, hw_tile=128))
    assert out_tiled.shape == (N, C, H, W), out_tiled.shape
    assert bool(jnp.allclose(out_tiled, ref, rtol=1e-4, atol=1e-4)), "tiled path mismatch"

    # bf16 feature map exercises the native-dtype rescale (no full-block f32 upcast).
    out_bf16 = jax.block_until_ready(es_se_forward(x.astype(jnp.bfloat16), params))
    assert out_bf16.dtype == jnp.bfloat16
    assert bool(jnp.allclose(out_bf16.astype(jnp.float32), ref, rtol=5e-2, atol=5e-2)), \
        "bf16 fused path mismatch"

    print("KERNEL_OK")
</pallas_src>

<mosaic_0001>
module attributes {stable_mosaic.version = 11 : i64} {
  func.func @_se_fused_kernel(%arg0: i32, %arg1: memref<2x16x256xf32, #tpu.memory_space<vmem>>, %arg2: memref<16x4xf32, #tpu.memory_space<vmem>>, %arg3: memref<1x4xf32, #tpu.memory_space<vmem>>, %arg4: memref<16x4xf32, #tpu.memory_space<vmem>>, %arg5: memref<1x16xf32, #tpu.memory_space<vmem>>, %arg6: memref<2x16x256xf32, #tpu.memory_space<vmem>>) attributes {dimension_semantics = [#tpu.dimension_semantics<parallel>], iteration_bounds = array<i64: 1>, scalar_prefetch = 0 : i64, scratch_operands = 0 : i64, tpu.core_type = #tpu.core_type<tc>, window_params = [{transform_indices = @transform_0, window_bounds = array<i64: 2, 16, 256>}, {pipeline_mode = #tpu.pipeline_mode<synchronous>, transform_indices = @transform_1, window_bounds = array<i64: 16, 4>}, {pipeline_mode = #tpu.pipeline_mode<synchronous>, transform_indices = @transform_2, window_bounds = array<i64: 1, 4>}, {pipeline_mode = #tpu.pipeline_mode<synchronous>, transform_indices = @transform_3, window_bounds = array<i64: 16, 4>}, {pipeline_mode = #tpu.pipeline_mode<synchronous>, transform_indices = @transform_4, window_bounds = array<i64: 1, 16>}, {transform_indices = @transform_5, window_bounds = array<i64: 2, 16, 256>}]} {
    %c0 = arith.constant 0 : index
    %c0_0 = arith.constant 0 : index
    %c0_1 = arith.constant 0 : index
    %0 = vector.load %arg1[%c0, %c0_0, %c0_1] : memref<2x16x256xf32, #tpu.memory_space<vmem>>, vector<2x16x256xf32>
    %cst = arith.constant dense<0.000000e+00> : vector<2x16xf32>
    %1 = vector.multi_reduction <add>, %0, %cst [2] : vector<2x16x256xf32> to vector<2x16xf32>
    %2 = vector.shape_cast %1 : vector<2x16xf32> to vector<2x16x1xf32>
    %cst_2 = arith.constant 3.906250e-03 : f32
    %3 = vector.broadcast %cst_2 : f32 to vector<2x16x1xf32>
    %4 = arith.mulf %2, %3 : vector<2x16x1xf32>
    %c0_3 = arith.constant 0 : index
    %c0_4 = arith.constant 0 : index
    %5 = vector.load %arg2[%c0_3, %c0_4] : memref<16x4xf32, #tpu.memory_space<vmem>>, vector<16x4xf32>
    %6 = vector.shape_cast %5 : vector<16x4xf32> to vector<1x16x4xf32>
    %7 = vector.broadcast %6 : vector<1x16x4xf32> to vector<2x16x4xf32>
    %8 = vector.broadcast %4 : vector<2x16x1xf32> to vector<2x16x4xf32>
    %9 = arith.mulf %7, %8 : vector<2x16x4xf32>
    %cst_5 = arith.constant dense<0.000000e+00> : vector<2x4xf32>
    %10 = vector.multi_reduction <add>, %9, %cst_5 [1] : vector<2x16x4xf32> to vector<2x4xf32>
    %c0_6 = arith.constant 0 : index
    %c0_7 = arith.constant 0 : index
    %11 = vector.load %arg3[%c0_6, %c0_7] : memref<1x4xf32, #tpu.memory_space<vmem>>, vector<1x4xf32>
    %12 = vector.broadcast %11 : vector<1x4xf32> to vector<2x4xf32>
    %13 = arith.addf %10, %12 : vector<2x4xf32>
    %cst_8 = arith.constant 0.000000e+00 : f32
    %14 = vector.broadcast %cst_8 : f32 to vector<2x4xf32>
    %15 = arith.maximumf %13, %14 : vector<2x4xf32>
    %c0_9 = arith.constant 0 : index
    %c0_10 = arith.constant 0 : index
    %16 = vector.load %arg4[%c0_9, %c0_10] : memref<16x4xf32, #tpu.memory_space<vmem>>, vector<16x4xf32>
    %17 = vector.shape_cast %16 : vector<16x4xf32> to vector<1x16x4xf32>
    %18 = vector.shape_cast %15 : vector<2x4xf32> to vector<2x1x4xf32>
    %19 = vector.broadcast %17 : vector<1x16x4xf32> to vector<2x16x4xf32>
    %20 = vector.broadcast %18 : vector<2x1x4xf32> to vector<2x16x4xf32>
    %21 = arith.mulf %19, %20 : vector<2x16x4xf32>
    %cst_11 = arith.constant dense<0.000000e+00> : vector<2x16xf32>
    %22 = vector.multi_reduction <add>, %21, %cst_11 [2] : vector<2x16x4xf32> to vector<2x16xf32>
    %c0_12 = arith.constant 0 : index
    %c0_13 = arith.constant 0 : index
    %23 = vector.load %arg5[%c0_12, %c0_13] : memref<1x16xf32, #tpu.memory_space<vmem>>, vector<1x16xf32>
    %24 = vector.broadcast %23 : vector<1x16xf32> to vector<2x16xf32>
    %25 = arith.addf %22, %24 : vector<2x16xf32>
    %cst_14 = arith.constant 0.166666672 : f32
    %26 = vector.broadcast %cst_14 : f32 to vector<2x16xf32>
    %27 = arith.mulf %25, %26 : vector<2x16xf32>
    %cst_15 = arith.constant 5.000000e-01 : f32
    %28 = vector.broadcast %cst_15 : f32 to vector<2x16xf32>
    %29 = arith.addf %27, %28 : vector<2x16xf32>
    %cst_16 = arith.constant 0.000000e+00 : f32
    %cst_17 = arith.constant 1.000000e+00 : f32
    %30 = vector.broadcast %cst_16 : f32 to vector<2x16xf32>
    %31 = arith.maximumf %30, %29 : vector<2x16xf32>
    %32 = vector.broadcast %cst_17 : f32 to vector<2x16xf32>
    %33 = arith.minimumf %32, %31 : vector<2x16xf32>
    %34 = vector.shape_cast %33 : vector<2x16xf32> to vector<2x16x1xf32>
    %35 = vector.broadcast %34 : vector<2x16x1xf32> to vector<2x16x256xf32>
    %36 = arith.mulf %0, %35 : vector<2x16x256xf32>
    %c0_18 = arith.constant 0 : index
    %c0_19 = arith.constant 0 : index
    %c0_20 = arith.constant 0 : index
    %37 = vector.load %arg6[%c0_18, %c0_19, %c0_20] : memref<2x16x256xf32, #tpu.memory_space<vmem>>, vector<2x16x256xf32>
    tpu.vector_store %arg6[%c0_18, %c0_19, %c0_20], %36 {strides = array<i32>} : memref<2x16x256xf32, #tpu.memory_space<vmem>>, vector<2x16x256xf32>,
    return
  }
  func.func @transform_0(%arg0: i32) -> (i32, i32, i32) {
    %c0_i32 = arith.constant 0 : i32
    %c0_i32_0 = arith.constant 0 : i32
    %c0_i32_1 = arith.constant 0 : i32
    return %arg0, %c0_i32, %c0_i32_0 : i32, i32, i32
  }
  func.func @transform_1(%arg0: i32) -> (i32, i32) {
    %c0_i32 = arith.constant 0 : i32
    %c0_i32_0 = arith.constant 0 : i32
    %c0_i32_1 = arith.constant 0 : i32
    return %c0_i32, %c0_i32_0 : i32, i32
  }
  func.func @transform_2(%arg0: i32) -> (i32, i32) {
    %c0_i32 = arith.constant 0 : i32
    %c0_i32_0 = arith.constant 0 : i32
    %c0_i32_1 = arith.constant 0 : i32
    return %c0_i32, %c0_i32_0 : i32, i32
  }
  func.func @transform_3(%arg0: i32) -> (i32, i32) {
    %c0_i32 = arith.constant 0 : i32
    %c0_i32_0 = arith.constant 0 : i32
    %c0_i32_1 = arith.constant 0 : i32
    return %c0_i32, %c0_i32_0 : i32, i32
  }
  func.func @transform_4(%arg0: i32) -> (i32, i32) {
    %c0_i32 = arith.constant 0 : i32
    %c0_i32_0 = arith.constant 0 : i32
    %c0_i32_1 = arith.constant 0 : i32
    return %c0_i32, %c0_i32_0 : i32, i32
  }
  func.func @transform_5(%arg0: i32) -> (i32, i32, i32) {
    %c0_i32 = arith.constant 0 : i32
    %c0_i32_0 = arith.constant 0 : i32
    %c0_i32_1 = arith.constant 0 : i32
    return %arg0, %c0_i32, %c0_i32_0 : i32, i32, i32
  }
}

</mosaic_0001>

<llo_original>
// kernel: tpu_custom_call.1
$region0: #{tpu_custom_call.1}
  #allocation0 [shape = 'u32[]', space=smem, size = 0x4, offset = 0x4, fixed_abs, tag = 'smem constant byte address 0x4 - core index']
  #allocation1 [shape = 'u32[144,128]{1,0:T(1,128)}', space=vmem, size = 0x12000, scoped, tag = 'internal scratch']
  %s0 = inlined_call_operand.hbm [shape: f32[2,16,256], index: 0, kind: input, shape index: {}]
  %s1 = inlined_call_operand.vmem [shape: f32[16,4], index: 1, kind: input, shape index: {}]
  %s2 = inlined_call_operand.vmem [shape: f32[1,4], index: 2, kind: input, shape index: {}]
  %s3 = inlined_call_operand.vmem [shape: f32[16,4], index: 3, kind: input, shape index: {}]
  %s4 = inlined_call_operand.vmem [shape: f32[1,16], index: 4, kind: input, shape index: {}]
  %s5 = inlined_call_operand.hbm [shape: f32[2,16,256], index: 5, kind: output, shape index: {}]
  %s6 = sld [smem:[#allocation0]]
  $region34: #{tpu_custom_call.1} parent=0
    _
  %s8 = ssub.s32 1, %s6
  %s9 = scalar_select 0, %s8, %s6
  $region1: #{tpu_custom_call.1} parent=0
    #allocation2 [shape = 'u8[32768]{0}', space=vmem, size = 0x8000, scoped, tag = 'input window, operand 0, single buffered']
    #allocation3 [shape = 's32[1]{0}', space=sflag, size = 0x4, scoped, tag = 'scoped memory for tpu_custom_call.1']
    #allocation4 [shape = 's32[1]{0}', space=sflag, size = 0x4, scoped, tag = 'scoped memory for tpu_custom_call.1']
    #allocation5 [shape = 'u8[32768]{0}', space=vmem, size = 0x8000, scoped, tag = 'output window, operand 0, single buffered']
    %10 = vsyncpa [#allocation3], 0
    %11 = vsyncpa [#allocation4], 0
    // Predicated region
    $region2: #{tpu_custom_call.1} parent=1 // pred_check
      _
    $region3: #{tpu_custom_call.1} parent=1 // pred_check_branch
      %13 = sbr.rel (0) target = $region5
    $region4: #{tpu_custom_call.1} parent=1 // pred_region
      %s15 = ssub.s32 1024, 1024
      %16 = vsyncadd [#allocation3], %s15
      %s17 = sshll.u32 [#allocation2], 4
      %s18 = int_to_ptr.vmem [resolvable:$true] %s17
      %23 = dma.hbm_to_vmem [thread:$0]  %s0, 1024, %s18, [#allocation3], 256, 256, 16
    $region5: #{tpu_custom_call.1} parent=1 // pred_fallthru
      _
    // Predicated region
    $region6: #{tpu_custom_call.1} parent=1 // pred_check
      _
    $region7: #{tpu_custom_call.1} parent=1 // pred_check_branch
      %25 = sbr.rel (0) target = $region9
    $region8: #{tpu_custom_call.1} parent=1 // pred_region
      _
    $region9: #{tpu_custom_call.1} parent=1 // pred_fallthru
      _
    // Predicated region
    $region10: #{tpu_custom_call.1} parent=1 // pred_check
      _
    $region11: #{tpu_custom_call.1} parent=1 // pred_check_branch
      %27 = sbr.rel (0) target = $region13
    $region12: #{tpu_custom_call.1} parent=1 // pred_region
      _
    $region13: #{tpu_custom_call.1} parent=1 // pred_fallthru
      _
    // Predicated region
    $region14: #{tpu_custom_call.1} parent=1 // pred_check
      _
    $region15: #{tpu_custom_call.1} parent=1 // pred_check_branch
      %29 = sbr.rel (0) target = $region17
    $region16: #{tpu_custom_call.1} parent=1 // pred_region
      _
    $region17: #{tpu_custom_call.1} parent=1 // pred_fallthru
      _
    // Predicated region
    $region18: #{tpu_custom_call.1} parent=1 // pred_check
      _
    $region19: #{tpu_custom_call.1} parent=1 // pred_check_branch
      %31 = sbr.rel (0) target = $region21
    $region20: #{tpu_custom_call.1} parent=1 // pred_region
      _
    $region21: #{tpu_custom_call.1} parent=1 // pred_fallthru
      _
    // Predicated region
    $region22: #{tpu_custom_call.1} parent=1 // pred_check
      _
    $region23: #{tpu_custom_call.1} parent=1 // pred_check_branch
      %33 = sbr.rel (0) target = $region25
    $region24: #{tpu_custom_call.1} parent=1 // pred_region
      %34 = dma.done [#allocation3], 1024
    $region25: #{tpu_custom_call.1} parent=1 // pred_fallthru
      _
    %v35 = vld [vmem:[#allocation2] sm:$0xff]
    %v36 = vld [vmem:[#allocation2 + $0x8] sm:$0xff]
    %v37 = vld [vmem:[#allocation2 + $0x10] sm:$0xff]
    %v38 = vld [vmem:[#allocation2 + $0x18] sm:$0xff]
    %v39 = vld [vmem:[#allocation2 + $0x20] sm:$0xff]
    %v40 = vld [vmem:[#allocation2 + $0x28] sm:$0xff]
    %v41 = vld [vmem:[#allocation2 + $0x30] sm:$0xff]
    %v42 = vld [vmem:[#allocation2 + $0x38] sm:$0xff]
    %v43 = vadd.f32 %v35, %v36
    %44 = vadd.xlane.f32.xlu0 %v43
    %v45 = vpop.xlane.xlu0 %44
    %v46 = vadd.f32 %v37, %v38
    %47 = vadd.xlane.f32.xlu0 %v46
    %v48 = vpop.xlane.xlu0 %47
    %v49 = vadd.f32 %v39, %v40
    %50 = vadd.xlane.f32.xlu0 %v49
    %v51 = vpop.xlane.xlu0 %50
    %v52 = vadd.f32 %v41, %v42
    %53 = vadd.xlane.f32.xlu0 %v52
    %v54 = vpop.xlane.xlu0 %53
    %v55 = vmul.f32 %v45, 0.00390625
    %v56 = vmul.f32 %v48, 0.00390625
    %v57 = vmul.f32 %v51, 0.00390625
    %v58 = vmul.f32 %v54, 0.00390625
    %v59 = vld [vmem:[%s1] sm:$0xff]
    %v60 = vld [vmem:[%s1 + $0x8] sm:$0xff]
    %v61 = vmul.f32 %v59, %v55
    %v62 = vmul.f32 %v60, %v56
    %v63 = vmul.f32 %v59, %v57
    %v64 = vmul.f32 %v60, %v58
    %vm65 = vcmask 31744
    %v66 = vsel %vm65, %v61, 0.0
    %v67 = vsel %vm65, %v62, 0.0
    %v68 = vadd.f32 %v66, %v67
    %v69 = vrot.slane %v68, 4
    %v70 = vadd.f32 %v68, %v69
    %v71 = vrot.slane %v70, 2
    %v72 = vadd.f32 %v70, %v71
    %v73 = vrot.slane %v72, 1
    %v74 = vadd.f32 %v72, %v73
    %v75 = vsel %vm65, %v63, 0.0
    %v76 = vsel %vm65, %v64, 0.0
    %v77 = vadd.f32 %v75, %v76
    %v78 = vrot.slane %v77, 4
    %v79 = vadd.f32 %v77, %v78
    %v80 = vrot.slane %v79, 2
    %v81 = vadd.f32 %v79, %v80
    %v82 = vrot.slane %v81, 1
    %v83 = vadd.f32 %v81, %v82
    %v84 = vld [vmem:[%s2] sm:$0x1]
    %v86 = vlaneseq
    %v87 = vshrl.u32 %v86, 7
    %v88 = vsub.s32 0, %v87
    %v89 = vrot.slane %v84, %v88
    %v91 = vadd.f32 %v74, %v89
    %v92 = vadd.f32 %v83, %v89
    %v93 = vmax.f32 %v91, 0.0
    %v94 = vmax.f32 %v92, 0.0
    %v95 = vld [vmem:[%s3] sm:$0xff]
    %v96 = vld [vmem:[%s3 + $0x8] sm:$0xff]
    %v97 = vlaneseq
    %v98 = vshrl.u32 %v97, 7
    %v99 = vsub.s32 0, %v98
    %v100 = vrot.slane %v93, %v99
    %v101 = vlaneseq
    %v102 = vshrl.u32 %v101, 7
    %v103 = vsub.s32 0, %v102
    %v104 = vrot.slane %v94, %v103
    %v105 = vmul.f32 %v95, %v100
    %v106 = vmul.f32 %v96, %v100
    %v107 = vmul.f32 %v95, %v104
    %v108 = vmul.f32 %v96, %v104
    %v109 = vsel %vm65, %v105, 0.0
    %110 = vadd.xlane.f32.xlu0 %v109
    %v111 = vpop.xlane.xlu0 %110
    %v112 = vsel %vm65, %v106, 0.0
    %113 = vadd.xlane.f32.xlu0 %v112
    %v114 = vpop.xlane.xlu0 %113
    %v115 = vsel %vm65, %v107, 0.0
    %116 = vadd.xlane.f32.xlu0 %v115
    %v117 = vpop.xlane.xlu0 %116
    %v118 = vsel %vm65, %v108, 0.0
    %119 = vadd.xlane.f32.xlu0 %v118
    %v120 = vpop.xlane.xlu0 %119
    %v121 = vld [vmem:[%s4] sm:$0x1]
    %v123 = vlaneseq
    %v124 = vshrl.u32 %v123, 7
    %v125 = vsub.s32 0, %v124
    %v126 = vrot.slane %v121, %v125
    %128 = vbcast.lane.b32.xlu0 %v126, 256
    %v129 = vpop.permute.xlu0 %128
    %s131 = sor.u32 256, 8
    %132 = vbcast.lane.b32.xlu0 %v126, %s131
    %v133 = vpop.permute.xlu0 %132
    %v136 = vadd.f32 %v111, %v129
    %v137 = vadd.f32 %v114, %v133
    %v138 = vadd.f32 %v117, %v129
    %v139 = vadd.f32 %v120, %v133
    %v140 = vmul.f32 %v136, 0.16666667
    %v141 = vmul.f32 %v137, 0.16666667
    %v142 = vmul.f32 %v138, 0.16666667
    %v143 = vmul.f32 %v139, 0.16666667
    %v144 = vadd.f32 %v140, 0.5
    %v145 = vadd.f32 %v141, 0.5
    %v146 = vadd.f32 %v142, 0.5
    %v147 = vadd.f32 %v143, 0.5
    %v148 = vmax.f32 %v144, 0.0
    %v149 = vmax.f32 %v145, 0.0
    %v150 = vmax.f32 %v146, 0.0
    %v151 = vmax.f32 %v147, 0.0
    %v152 = vmin.f32 %v148, 1.0
    %v153 = vmin.f32 %v149, 1.0
    %v154 = vmin.f32 %v150, 1.0
    %v155 = vmin.f32 %v151, 1.0
    %157 = vset.pattern.permute.xlu0 0
    %158 = vperm.xlu0 %157, %v152
    %v159 = vpop.permute.xlu0 %158
    %162 = vset.pattern.permute.xlu0 0
    %163 = vperm.xlu0 %162, %v153
    %v164 = vpop.permute.xlu0 %163
    %167 = vset.pattern.permute.xlu0 0
    %168 = vperm.xlu0 %167, %v154
    %v169 = vpop.permute.xlu0 %168
    %172 = vset.pattern.permute.xlu0 0
    %173 = vperm.xlu0 %172, %v155
    %v174 = vpop.permute.xlu0 %173
    %v176 = vmul.f32 %v35, %v159
    %v177 = vmul.f32 %v36, %v159
    %v178 = vmul.f32 %v37, %v164
    %v179 = vmul.f32 %v38, %v164
    %v180 = vmul.f32 %v39, %v169
    %v181 = vmul.f32 %v40, %v169
    %v182 = vmul.f32 %v41, %v174
    %v183 = vmul.f32 %v42, %v174
    %184 = vst [vmem:[#allocation5] sm:$0xff] %v176
    %185 = vst [vmem:[#allocation5 + $0x8] sm:$0xff] %v177
    %186 = vst [vmem:[#allocation5 + $0x10] sm:$0xff] %v178
    %187 = vst [vmem:[#allocation5 + $0x18] sm:$0xff] %v179
    %188 = vst [vmem:[#allocation5 + $0x20] sm:$0xff] %v180
    %189 = vst [vmem:[#allocation5 + $0x28] sm:$0xff] %v181
    %190 = vst [vmem:[#allocation5 + $0x30] sm:$0xff] %v182
    %191 = vst [vmem:[#allocation5 + $0x38] sm:$0xff] %v183
    // Predicated region
    $region26: #{tpu_custom_call.1} parent=1 // pred_check
      _
    $region27: #{tpu_custom_call.1} parent=1 // pred_check_branch
      %193 = sbr.rel (0) target = $region29
    $region28: #{tpu_custom_call.1} parent=1 // pred_region
      %s195 = ssub.s32 1024, 1024
      %196 = vsyncadd [#allocation4], %s195
      %s197 = sshll.u32 [#allocation5], 4
      %s198 = int_to_ptr.vmem [resolvable:$true] %s197
      %203 = dma.vmem_to_hbm [thread:$0]  %s198, 1024, %s5, [#allocation4], 256, 256, 16
    $region29: #{tpu_custom_call.1} parent=1 // pred_fallthru
      _
    // Predicated region
    $region30: #{tpu_custom_call.1} parent=1 // pred_check
      _
    $region31: #{tpu_custom_call.1} parent=1 // pred_check_branch
      %205 = sbr.rel (0) target = $region33
    $region32: #{tpu_custom_call.1} parent=1 // pred_region
      %206 = dma.done [#allocation4], 1024
    $region33: #{tpu_custom_call.1} parent=1 // pred_fallthru
      _
    %207 = vsyncpa [#allocation3], 1
    %208 = vsyncpa [#allocation4], 1

</llo_original>
